<compile_context>
chip_gen: v5e
topology: v5e:2x2
jax: 0.10.0
libtpu: 0.0.40
codegen_flags: <defaults>
</compile_context>

<pallas_src>
import jax
import jax.numpy as jnp
from jax.experimental import pallas as pl
from jax.experimental.pallas import tpu as pltpu

FEAT = 18                 # fixed by the module: .view(-1, 18) (semantics only)
BLOCK_ELEMS = 256 * 1024  # ~1 MiB f32 per input block buffer (VMEM-safe v5e..v7x)
N_SPLIT = 2               # leading "parallel" grid axis


def _pick_rows(n):
    """Smallest-waste leading dim that divides n exactly (n is a multiple of 18)."""
    for r in (8, 6, 2, 1):
        if n % r == 0:
            return r
    return 1


def _make_kernel(tps, cb, c_total):
    def kernel(x_ref, t_ref, m_ref, sum_ref, cnt_ref, sumsq_acc, cnt_acc):
        i = pl.program_id(1)  # reduction axis (column tiles within this split)

        @pl.when(i == 0)
        def _():
            sumsq_acc[...] = jnp.zeros_like(sumsq_acc)
            cnt_acc[...] = jnp.zeros_like(cnt_acc)

        x = x_ref[...].astype(jnp.float32)
        t = t_ref[...].astype(jnp.float32)
        m = m_ref[...]
        keep = jnp.logical_not(m) if m.dtype == jnp.bool_ else (m == 0)

        # Unclamped global column index of this grid step.  Columns >= c_total
        # (ragged tail garbage or duplicated overhang blocks) are dropped.
        col0 = (pl.program_id(0) * tps + i) * cb
        cols = col0 + jax.lax.broadcasted_iota(jnp.int32, x.shape, 1)
        keep = jnp.logical_and(keep, cols < c_total)

        diff = x - t
        # where (select), not multiply: OOB garbage may be NaN/Inf.
        sumsq_acc[...] += jnp.where(keep, diff * diff, 0.0)
        cnt_acc[...] += keep.astype(jnp.float32)

        @pl.when(i == pl.num_programs(1) - 1)
        def _():
            sum_ref[...] = jnp.zeros_like(sum_ref) + jnp.sum(sumsq_acc[...])
            cnt_ref[...] = jnp.zeros_like(cnt_ref) + jnp.sum(cnt_acc[...])

    return kernel


def custom_mse_loss(inp, tgt, mask, *, block_elems=BLOCK_ELEMS, n_split=N_SPLIT):
    """Pallas implementation of CustomMSELoss.forward (masked MSE)."""
    n = inp.size
    assert tgt.size == n and mask.size == n
    if n == 0:
        return jnp.float32(jnp.nan)

    r = _pick_rows(n)
    c = n // r

    # Pure re-views (no pad, no dtype change): same flat order for all three
    # arrays, so element pairing is preserved; the reduction is order-invariant.
    x = inp.reshape(r, c)
    t = tgt.reshape(r, c)
    m = mask.reshape(r, c)

    # Column-block width: multiple of 128 (lane dense), or the full width for
    # small inputs; sized so one f32 block buffer is ~block_elems/ (padded rows).
    r_pad = max(8, ((r + 7) // 8) * 8)
    cb_max = max(128, (block_elems // r_pad) // 128 * 128)
    cb = c if c <= cb_max else cb_max

    ncb = pl.cdiv(c, cb)                    # real column blocks
    n_split = max(1, min(n_split, ncb))     # skip the split for tiny inputs
    tps = pl.cdiv(ncb, n_split)             # tiles per split (reduction axis)

    def in_map(s, i):
        # Clamp so DMAs stay in-bounds; duplicated overhang blocks are masked
        # out inside the kernel via the *unclamped* column index.
        return (0, jnp.minimum(s * tps + i, ncb - 1))

    in_spec = pl.BlockSpec((r, cb), in_map)
    out_spec = pl.BlockSpec((1, 1, 128), lambda s, i: (s, 0, 0))

    sumsq, cnt = pl.pallas_call(
        _make_kernel(tps, cb, c),
        out_shape=(jax.ShapeDtypeStruct((n_split, 1, 128), jnp.float32),
                   jax.ShapeDtypeStruct((n_split, 1, 128), jnp.float32)),
        grid_spec=pltpu.PrefetchScalarGridSpec(
            num_scalar_prefetch=0,
            grid=(n_split, tps),
            in_specs=[in_spec, in_spec, in_spec],
            out_specs=(out_spec, out_spec),
            scratch_shapes=[pltpu.VMEM((r, cb), jnp.float32),
                            pltpu.VMEM((r, cb), jnp.float32)],
        ),
        compiler_params=pltpu.CompilerParams(
            dimension_semantics=("parallel", "arbitrary")),
    )(x, t, m)

    # Tiny final combine + division (each split wrote its scalar to lane 0).
    return jnp.sum(sumsq[:, 0, 0]) / jnp.sum(cnt[:, 0, 0])


if __name__ == "__main__":
    key = jax.random.PRNGKey(0)
    k1, k2, k3 = jax.random.split(key, 3)

    def ref_loss(i_, t_, m_):
        keep = jnp.logical_not(m_).astype(jnp.float32).reshape(-1)
        d = (i_.reshape(-1) - t_.reshape(-1)).astype(jnp.float32)
        return jnp.sum(d * d * keep) / jnp.sum(keep)

    # Case 1: small shapes consistent with the module (view(-1, 18)).
    inp = jax.random.normal(k1, (4, 8, FEAT), dtype=jnp.float32)
    tgt = jax.random.normal(k2, (4, 8, FEAT), dtype=jnp.float32)
    mask = jax.random.bernoulli(k3, p=0.3, shape=(4 * 8, FEAT))   # True = ignored

    loss = custom_mse_loss(inp, tgt, mask)
    jax.block_until_ready(loss)
    assert jnp.allclose(loss, ref_loss(inp, tgt, mask), rtol=1e-4, atol=1e-6), loss

    # Case 2 (still small): small block_elems so the run exercises multi-step
    # accumulation, the 2-way split, the ragged partial last block and the
    # overhang clamp.
    k4, k5, k6 = jax.random.split(jax.random.PRNGKey(1), 3)
    inp2 = jax.random.normal(k4, (256, 30, FEAT), dtype=jnp.float32)
    tgt2 = jax.random.normal(k5, (256, 30, FEAT), dtype=jnp.float32)
    mask2 = jax.random.bernoulli(k6, p=0.5, shape=(256 * 30, FEAT))
    loss2 = custom_mse_loss(inp2, tgt2, mask2, block_elems=8192)
    jax.block_until_ready(loss2)
    assert jnp.allclose(loss2, ref_loss(inp2, tgt2, mask2), rtol=1e-3, atol=1e-6), loss2

    print("KERNEL_OK")
</pallas_src>

<mosaic_0001>
module attributes {stable_mosaic.version = 11 : i64} {
  func.func @kernel(%arg0: i32, %arg1: i32, %arg2: memref<8x72xf32, #tpu.memory_space<vmem>>, %arg3: memref<8x72xf32, #tpu.memory_space<vmem>>, %arg4: memref<8x72xi32, #tpu.memory_space<vmem>>, %arg5: memref<1x1x128xf32, #tpu.memory_space<vmem>>, %arg6: memref<1x1x128xf32, #tpu.memory_space<vmem>>, %arg7: memref<8x72xf32, #tpu.memory_space<vmem>>, %arg8: memref<8x72xf32, #tpu.memory_space<vmem>>) attributes {dimension_semantics = [#tpu.dimension_semantics<parallel>, #tpu.dimension_semantics<arbitrary>], iteration_bounds = array<i64: 1, 1>, scalar_prefetch = 0 : i64, scratch_operands = 2 : i64, tpu.core_type = #tpu.core_type<tc>, window_params = [{transform_indices = @transform_0, window_bounds = array<i64: 8, 72>}, {transform_indices = @transform_1, window_bounds = array<i64: 8, 72>}, {transform_indices = @transform_2, window_bounds = array<i64: 8, 72>}, {transform_indices = @transform_3, window_bounds = array<i64: 1, 1, 128>}, {transform_indices = @transform_4, window_bounds = array<i64: 1, 1, 128>}]} {
    %c0_i32 = arith.constant 0 : i32
    %0 = arith.cmpi eq, %arg1, %c0_i32 : i32
    %1 = arith.extui %0 : i1 to i32
    %c0_i32_0 = arith.constant 0 : i32
    %2 = arith.cmpi ne, %1, %c0_i32_0 : i32
    scf.if %2 {
      %cst_19 = arith.constant 0.000000e+00 : f32
      %32 = vector.broadcast %cst_19 : f32 to vector<8x72xf32>
      %c0_20 = arith.constant 0 : index
      %c0_21 = arith.constant 0 : index
      %33 = vector.load %arg7[%c0_20, %c0_21] : memref<8x72xf32, #tpu.memory_space<vmem>>, vector<8x72xf32>
      tpu.vector_store %arg7[%c0_20, %c0_21], %32 {strides = array<i32>} : memref<8x72xf32, #tpu.memory_space<vmem>>, vector<8x72xf32>,
      %cst_22 = arith.constant 0.000000e+00 : f32
      %34 = vector.broadcast %cst_22 : f32 to vector<8x72xf32>
      %c0_23 = arith.constant 0 : index
      %c0_24 = arith.constant 0 : index
      %35 = vector.load %arg8[%c0_23, %c0_24] : memref<8x72xf32, #tpu.memory_space<vmem>>, vector<8x72xf32>
      tpu.vector_store %arg8[%c0_23, %c0_24], %34 {strides = array<i32>} : memref<8x72xf32, #tpu.memory_space<vmem>>, vector<8x72xf32>,
    } else {
    }
    %c0 = arith.constant 0 : index
    %c0_1 = arith.constant 0 : index
    %3 = vector.load %arg2[%c0, %c0_1] : memref<8x72xf32, #tpu.memory_space<vmem>>, vector<8x72xf32>
    %c0_2 = arith.constant 0 : index
    %c0_3 = arith.constant 0 : index
    %4 = vector.load %arg3[%c0_2, %c0_3] : memref<8x72xf32, #tpu.memory_space<vmem>>, vector<8x72xf32>
    %c0_4 = arith.constant 0 : index
    %c0_5 = arith.constant 0 : index
    %5 = vector.load %arg4[%c0_4, %c0_5] : memref<8x72xi32, #tpu.memory_space<vmem>>, vector<8x72xi32>
    %cst = arith.constant dense<0> : vector<8x72xi32>
    %6 = arith.cmpi ne, %5, %cst : vector<8x72xi32>
    %cst_6 = arith.constant dense<true> : vector<8x72xi1>
    %7 = arith.xori %6, %cst_6 : vector<8x72xi1>
    %c1_i32 = arith.constant 1 : i32
    %8 = arith.muli %arg0, %c1_i32 : i32
    %9 = arith.addi %8, %arg1 : i32
    %c72_i32 = arith.constant 72 : i32
    %10 = arith.muli %9, %c72_i32 : i32
    %11 = tpu.iota {dimensions = array<i32: 1>} : vector<8x72xi32>
    %12 = vector.broadcast %10 : i32 to vector<8x72xi32>
    %13 = arith.addi %12, %11 : vector<8x72xi32>
    %c72_i32_7 = arith.constant 72 : i32
    %14 = vector.broadcast %c72_i32_7 : i32 to vector<8x72xi32>
    %15 = arith.cmpi slt, %13, %14 : vector<8x72xi32>
    %16 = arith.andi %7, %15 : vector<8x72xi1>
    %17 = arith.subf %3, %4 : vector<8x72xf32>
    %c0_8 = arith.constant 0 : index
    %c0_9 = arith.constant 0 : index
    %18 = vector.load %arg7[%c0_8, %c0_9] : memref<8x72xf32, #tpu.memory_space<vmem>>, vector<8x72xf32>
    %19 = arith.mulf %17, %17 : vector<8x72xf32>
    %cst_10 = arith.constant 0.000000e+00 : f32
    %20 = vector.broadcast %cst_10 : f32 to vector<8x72xf32>
    %21 = arith.select %16, %19, %20 : vector<8x72xi1>, vector<8x72xf32>
    %22 = arith.addf %18, %21 : vector<8x72xf32>
    %c0_11 = arith.constant 0 : index
    %c0_12 = arith.constant 0 : index
    %23 = vector.load %arg7[%c0_11, %c0_12] : memref<8x72xf32, #tpu.memory_space<vmem>>, vector<8x72xf32>
    tpu.vector_store %arg7[%c0_11, %c0_12], %22 {strides = array<i32>} : memref<8x72xf32, #tpu.memory_space<vmem>>, vector<8x72xf32>,
    %c0_13 = arith.constant 0 : index
    %c0_14 = arith.constant 0 : index
    %24 = vector.load %arg8[%c0_13, %c0_14] : memref<8x72xf32, #tpu.memory_space<vmem>>, vector<8x72xf32>
    %25 = arith.extui %16 : vector<8x72xi1> to vector<8x72xi32>
    %26 = arith.sitofp %25 : vector<8x72xi32> to vector<8x72xf32>
    %27 = arith.addf %24, %26 : vector<8x72xf32>
    %c0_15 = arith.constant 0 : index
    %c0_16 = arith.constant 0 : index
    %28 = vector.load %arg8[%c0_15, %c0_16] : memref<8x72xf32, #tpu.memory_space<vmem>>, vector<8x72xf32>
    tpu.vector_store %arg8[%c0_15, %c0_16], %27 {strides = array<i32>} : memref<8x72xf32, #tpu.memory_space<vmem>>, vector<8x72xf32>,
    %c0_i32_17 = arith.constant 0 : i32
    %29 = arith.cmpi eq, %arg1, %c0_i32_17 : i32
    %30 = arith.extui %29 : i1 to i32
    %c0_i32_18 = arith.constant 0 : i32
    %31 = arith.cmpi ne, %30, %c0_i32_18 : i32
    scf.if %31 {
      %cst_19 = arith.constant 0.000000e+00 : f32
      %32 = vector.broadcast %cst_19 : f32 to vector<1x1x128xf32>
      %c0_20 = arith.constant 0 : index
      %c0_21 = arith.constant 0 : index
      %33 = vector.load %arg7[%c0_20, %c0_21] : memref<8x72xf32, #tpu.memory_space<vmem>>, vector<8x72xf32>
      %34 = vector.shape_cast %33 : vector<8x72xf32> to vector<1x8x72xf32>
      %cst_22 = arith.constant dense<0.000000e+00> : vector<1xf32>
      %35 = vector.multi_reduction <add>, %34, %cst_22 [1, 2] : vector<1x8x72xf32> to vector<1xf32>
      %36 = vector.shape_cast %35 : vector<1xf32> to vector<1x1x1xf32>
      %37 = vector.extract %36[0, 0, 0] : f32 from vector<1x1x1xf32>
      %38 = vector.broadcast %37 : f32 to vector<1x1x128xf32>
      %39 = arith.addf %32, %38 : vector<1x1x128xf32>
      %c0_23 = arith.constant 0 : index
      %c0_24 = arith.constant 0 : index
      %c0_25 = arith.constant 0 : index
      %40 = vector.load %arg5[%c0_23, %c0_24, %c0_25] : memref<1x1x128xf32, #tpu.memory_space<vmem>>, vector<1x1x128xf32>
      tpu.vector_store %arg5[%c0_23, %c0_24, %c0_25], %39 {strides = array<i32>} : memref<1x1x128xf32, #tpu.memory_space<vmem>>, vector<1x1x128xf32>,
      %cst_26 = arith.constant 0.000000e+00 : f32
      %41 = vector.broadcast %cst_26 : f32 to vector<1x1x128xf32>
      %c0_27 = arith.constant 0 : index
      %c0_28 = arith.constant 0 : index
      %42 = vector.load %arg8[%c0_27, %c0_28] : memref<8x72xf32, #tpu.memory_space<vmem>>, vector<8x72xf32>
      %43 = vector.shape_cast %42 : vector<8x72xf32> to vector<1x8x72xf32>
      %cst_29 = arith.constant dense<0.000000e+00> : vector<1xf32>
      %44 = vector.multi_reduction <add>, %43, %cst_29 [1, 2] : vector<1x8x72xf32> to vector<1xf32>
      %45 = vector.shape_cast %44 : vector<1xf32> to vector<1x1x1xf32>
      %46 = vector.extract %45[0, 0, 0] : f32 from vector<1x1x1xf32>
      %47 = vector.broadcast %46 : f32 to vector<1x1x128xf32>
      %48 = arith.addf %41, %47 : vector<1x1x128xf32>
      %c0_30 = arith.constant 0 : index
      %c0_31 = arith.constant 0 : index
      %c0_32 = arith.constant 0 : index
      %49 = vector.load %arg6[%c0_30, %c0_31, %c0_32] : memref<1x1x128xf32, #tpu.memory_space<vmem>>, vector<1x1x128xf32>
      tpu.vector_store %arg6[%c0_30, %c0_31, %c0_32], %48 {strides = array<i32>} : memref<1x1x128xf32, #tpu.memory_space<vmem>>, vector<1x1x128xf32>,
    } else {
    }
    return
  }
  func.func @transform_0(%arg0: i32, %arg1: i32) -> (i32, i32) {
    %c1_i32 = arith.constant 1 : i32
    %0 = arith.muli %arg0, %c1_i32 : i32
    %1 = arith.addi %0, %arg1 : i32
    %c0_i32 = arith.constant 0 : i32
    %2 = arith.minsi %1, %c0_i32 : i32
    %c0_i32_0 = arith.constant 0 : i32
    %c0_i32_1 = arith.constant 0 : i32
    return %c0_i32_0, %2 : i32, i32
  }
  func.func @transform_1(%arg0: i32, %arg1: i32) -> (i32, i32) {
    %c1_i32 = arith.constant 1 : i32
    %0 = arith.muli %arg0, %c1_i32 : i32
    %1 = arith.addi %0, %arg1 : i32
    %c0_i32 = arith.constant 0 : i32
    %2 = arith.minsi %1, %c0_i32 : i32
    %c0_i32_0 = arith.constant 0 : i32
    %c0_i32_1 = arith.constant 0 : i32
    return %c0_i32_0, %2 : i32, i32
  }
  func.func @transform_2(%arg0: i32, %arg1: i32) -> (i32, i32) {
    %c1_i32 = arith.constant 1 : i32
    %0 = arith.muli %arg0, %c1_i32 : i32
    %1 = arith.addi %0, %arg1 : i32
    %c0_i32 = arith.constant 0 : i32
    %2 = arith.minsi %1, %c0_i32 : i32
    %c0_i32_0 = arith.constant 0 : i32
    %c0_i32_1 = arith.constant 0 : i32
    return %c0_i32_0, %2 : i32, i32
  }
  func.func @transform_3(%arg0: i32, %arg1: i32) -> (i32, i32, i32) {
    %c0_i32 = arith.constant 0 : i32
    %c0_i32_0 = arith.constant 0 : i32
    %c0_i32_1 = arith.constant 0 : i32
    return %arg0, %c0_i32, %c0_i32_0 : i32, i32, i32
  }
  func.func @transform_4(%arg0: i32, %arg1: i32) -> (i32, i32, i32) {
    %c0_i32 = arith.constant 0 : i32
    %c0_i32_0 = arith.constant 0 : i32
    %c0_i32_1 = arith.constant 0 : i32
    return %arg0, %c0_i32, %c0_i32_0 : i32, i32, i32
  }
}

</mosaic_0001>

<llo_original>
// kernel: tpu_custom_call.1
$region0: #{tpu_custom_call.1}
  #allocation0 [shape = 'u32[]', space=smem, size = 0x4, offset = 0x4, fixed_abs, tag = 'smem constant byte address 0x4 - core index']
  #allocation1 [shape = 'u32[72,128]{1,0:T(1,128)}', space=vmem, size = 0x9000, scoped, tag = 'internal scratch']
  #allocation2 [shape = 'f32[8,72]{1,0:T(8,128)}', space=vmem, size = 0x1000, scoped, tag = 'scratch operand']
  #allocation3 [shape = 'f32[8,72]{1,0:T(8,128)}', space=vmem, size = 0x1000, scoped, tag = 'scratch operand']
  %s0 = inlined_call_operand.vmem [shape: f32[8,72], index: 0, kind: input, shape index: {}]
  %s1 = inlined_call_operand.hbm [shape: f32[8,72], index: 1, kind: input, shape index: {}]
  %s2 = inlined_call_operand.vmem [shape: s32[8,72], index: 2, kind: input, shape index: {}]
  %s3 = inlined_call_operand.hbm [shape: f32[1,1,128], index: 3, kind: output, shape index: {0}]
  %s4 = inlined_call_operand.hbm [shape: f32[1,1,128], index: 4, kind: output, shape index: {1}]
  %5 = xla_tuple %s3, %s4
  %s6 = sld [smem:[#allocation0]]
  $region42: #{tpu_custom_call.1} parent=0
    _
  %s8 = ssub.s32 1, %s6
  %s9 = scalar_select 0, %s8, %s6
  $region1: #{tpu_custom_call.1} parent=0
    #allocation4 [shape = 'u8[4096]{0}', space=vmem, size = 0x1000, scoped, tag = 'input window, operand 1, single buffered']
    #allocation5 [shape = 's32[1]{0}', space=sflag, size = 0x4, scoped, tag = 'scoped memory for tpu_custom_call.1']
    #allocation6 [shape = 's32[1]{0}', space=sflag, size = 0x4, scoped, tag = 'scoped memory for tpu_custom_call.1']
    #allocation7 [shape = 'u8[512]{0}', space=vmem, size = 0x400, scoped, tag = 'output window, operand 0, single buffered']
    #allocation8 [shape = 'u8[512]{0}', space=vmem, size = 0x400, scoped, tag = 'output window, operand 1, single buffered']
    #allocation9 [shape = 's32[1]{0}', space=sflag, size = 0x4, scoped, tag = 'scoped memory for tpu_custom_call.1']
    %10 = vsyncpa [#allocation5], 0
    %11 = vsyncpa [#allocation6], 0
    %12 = vsyncpa [#allocation9], 0
    // Predicated region
    $region2: #{tpu_custom_call.1} parent=1 // pred_check
      _
    $region3: #{tpu_custom_call.1} parent=1 // pred_check_branch
      %14 = sbr.rel (0) target = $region5
    $region4: #{tpu_custom_call.1} parent=1 // pred_region
      %s15 = sadd.s32 0, 0
      %p16 = scmp.lt.s32.totalorder %s15, 0
      %s17 = scalar_select %p16, %s15, 0
      %p18 = scmp.lt.s32.totalorder %s17, 0
      %s19 = scalar_select %p18, %s17, 0
      %s20 = smul.addr %s19, 8
      %s21 = scalar_lea.vmem %s0, %s20
      %s22 = sadd.s32 0, 0
      %p23 = scmp.lt.s32.totalorder %s22, 0
      %s24 = scalar_select %p23, %s22, 0
    $region5: #{tpu_custom_call.1} parent=1 // pred_fallthru
      _
    // Predicated region
    $region6: #{tpu_custom_call.1} parent=1 // pred_check
      _
    $region7: #{tpu_custom_call.1} parent=1 // pred_check_branch
      %26 = sbr.rel (0) target = $region9
    $region8: #{tpu_custom_call.1} parent=1 // pred_region
      %s27 = sadd.s32 0, 0
      %p28 = scmp.lt.s32.totalorder %s27, 0
      %s29 = scalar_select %p28, %s27, 0
      %31 = vsyncadd [#allocation5], 0
      %s32 = smul.addr %s29, 8
      %s33 = scalar_lea.hbm %s1, %s32
      %s35 = sshll.u32 %s33, 4
      %s36 = int_to_ptr.hbm [resolvable:$true] %s35
      %s37 = sshll.u32 [#allocation4], 4
      %s38 = int_to_ptr.vmem [resolvable:$true] %s37
      %40 = dma.hbm_to_vmem [thread:$0]  %s36, 128, %s38, [#allocation5]
    $region9: #{tpu_custom_call.1} parent=1 // pred_fallthru
      _
    // Predicated region
    $region10: #{tpu_custom_call.1} parent=1 // pred_check
      _
    $region11: #{tpu_custom_call.1} parent=1 // pred_check_branch
      %42 = sbr.rel (0) target = $region13
    $region12: #{tpu_custom_call.1} parent=1 // pred_region
      %s43 = sadd.s32 0, 0
      %p44 = scmp.lt.s32.totalorder %s43, 0
      %s45 = scalar_select %p44, %s43, 0
      %p46 = scmp.lt.s32.totalorder %s45, 0
      %s47 = scalar_select %p46, %s45, 0
      %s48 = smul.addr %s47, 8
      %s49 = scalar_lea.vmem %s2, %s48
      %s50 = sadd.s32 0, 0
      %p51 = scmp.lt.s32.totalorder %s50, 0
      %s52 = scalar_select %p51, %s50, 0
    $region13: #{tpu_custom_call.1} parent=1 // pred_fallthru
      _
    // Predicated region
    $region14: #{tpu_custom_call.1} parent=1 // pred_check
      _
    $region15: #{tpu_custom_call.1} parent=1 // pred_check_branch
      %54 = sbr.rel (0) target = $region17
    $region16: #{tpu_custom_call.1} parent=1 // pred_region
      %56 = dma.done [#allocation5], 128
    $region17: #{tpu_custom_call.1} parent=1 // pred_fallthru
      _
    %s57 = sadd.s32 0, 0
    %p58 = scmp.lt.s32.totalorder %s57, 0
    %s59 = scalar_select %p58, %s57, 0
    %p60 = scmp.lt.s32.totalorder %s59, 0
    %s61 = scalar_select %p60, %s59, 0
    %s62 = smul.addr %s61, 8
    %s63 = scalar_lea.vmem %s0, %s62
    %s64 = sadd.s32 0, 0
    %p65 = scmp.lt.s32.totalorder %s64, 0
    %s66 = scalar_select %p65, %s64, 0
    %p67 = scmp.lt.s32.totalorder %s66, 0
    %s68 = scalar_select %p67, %s66, 0
    %s69 = smul.addr %s68, 8
    %s70 = scalar_lea.vmem %s2, %s69
    %s71 = sadd.s32 0, 0
    %p72 = scmp.lt.s32.totalorder %s71, 0
    %s73 = scalar_select %p72, %s71, 0
    %p74 = scmp.lt.s32.totalorder %s73, 0
    %s75 = scalar_select %p74, %s73, 0
    %s76 = smul.addr %s75, 8
    %s77 = scalar_lea.vmem %s0, %s76
    %s78 = sadd.s32 0, 0
    %p79 = scmp.lt.s32.totalorder %s78, 0
    %s80 = scalar_select %p79, %s78, 0
    %s81 = sadd.s32 0, 0
    %p82 = scmp.lt.s32.totalorder %s81, 0
    %s83 = scalar_select %p82, %s81, 0
    %s84 = sadd.s32 0, 0
    %p85 = scmp.lt.s32.totalorder %s84, 0
    %s86 = scalar_select %p85, %s84, 0
    %p87 = scmp.lt.s32.totalorder %s86, 0
    %s88 = scalar_select %p87, %s86, 0
    %s89 = smul.addr %s88, 8
    %s90 = scalar_lea.vmem %s2, %s89
    %s91 = sadd.s32 0, 0
    %p92 = scmp.lt.s32.totalorder %s91, 0
    %s93 = scalar_select %p92, %s91, 0
    %p94 = scmp.eq.s32.totalorder 0, 0
    // Predicated region
    $region18: #{tpu_custom_call.1} parent=1 // pred_check
      %p95 = pneg %p94
    $region19: #{tpu_custom_call.1} parent=1 // pred_check_branch
      %97 = sbr.rel (%p95) target = $region21
    $region20: #{tpu_custom_call.1} parent=1 // pred_region
      %vm98 = vcmask 588800
      %99 = vst.msk [vmem:[#allocation2] sm:$0xff] %vm98, 0.0
      %100 = vst.msk [vmem:[#allocation3] sm:$0xff] %vm98, 0.0
    $region21: #{tpu_custom_call.1} parent=1 // pred_fallthru
      _
    %v101 = vld [vmem:[%s77] sm:$0xff]
    %v102 = vld [vmem:[#allocation4] sm:$0xff]
    %v103 = vld [vmem:[%s90] sm:$0xff]
    %vm104 = vcmp.ne.s32.totalorder %v103, 0
    %vm105 = vmxor %vm104, 1
    %s106 = sadd.s32 0, 0
    %s107 = smul.u32 %s106, 72
    %v108 = vlaneseq
    %v109 = vand.u32 %v108, 127
    %v110 = vstv %s107
    %v111 = vadd.s32 %v110, %v109
    %vm112 = vcmp.lt.s32.totalorder %v111, 72
    %vm113 = vmand %vm105, %vm112
    %v114 = vsub.f32 %v101, %v102
    %v115 = vld [vmem:[#allocation2] sm:$0xff]
    %v116 = vmul.f32 %v114, %v114
    %v117 = vsel %vm113, %v116, 0.0
    %v118 = vadd.f32 %v115, %v117
    %vm119 = vcmask 588800
    %120 = vst.msk [vmem:[#allocation2] sm:$0xff] %vm119, %v118
    %v121 = vld [vmem:[#allocation3] sm:$0xff]
    %v122 = vsel %vm113, 1, 0
    %v123 = vcvt.s32.f32 %v122
    %v124 = vadd.f32 %v121, %v123
    %125 = vst.msk [vmem:[#allocation3] sm:$0xff] %vm119, %v124
    // Predicated region
    $region22: #{tpu_custom_call.1} parent=1 // pred_check
      %p126 = pneg %p94
    $region23: #{tpu_custom_call.1} parent=1 // pred_check_branch
      %128 = sbr.rel (%p126) target = $region25
    $region24: #{tpu_custom_call.1} parent=1 // pred_region
      %v129 = vld [vmem:[#allocation2] sm:$0xff]
      %v130 = vsel %vm119, %v129, 0.0
      %131 = vadd.xlane.f32.xlu0 %v130
      %v132 = vpop.xlane.xlu0 %131
      %v133 = vrot.slane %v132, 4
      %v134 = vadd.f32 %v132, %v133
      %v135 = vrot.slane %v134, 2
      %v136 = vadd.f32 %v134, %v135
      %v137 = vrot.slane %v136, 1
      %v138 = vadd.f32 %v136, %v137
      %s139 = vtos %v138
      %v140 = vstv %s139
      %v141 = vadd.f32 %v140, 0.0
      %142 = vst [vmem:[#allocation7] sm:$0x1] %v141
      %v143 = vld [vmem:[#allocation3] sm:$0xff]
      %v144 = vsel %vm119, %v143, 0.0
      %145 = vadd.xlane.f32.xlu0 %v144
      %v146 = vpop.xlane.xlu0 %145
      %v147 = vrot.slane %v146, 4
      %v148 = vadd.f32 %v146, %v147
      %v149 = vrot.slane %v148, 2
      %v150 = vadd.f32 %v148, %v149
      %v151 = vrot.slane %v150, 1
      %v152 = vadd.f32 %v150, %v151
      %s153 = vtos %v152
      %v154 = vstv %s153
      %v155 = vadd.f32 %v154, 0.0
      %156 = vst [vmem:[#allocation8] sm:$0x1] %v155
    $region25: #{tpu_custom_call.1} parent=1 // pred_fallthru
      _
    // Predicated region
    $region26: #{tpu_custom_call.1} parent=1 // pred_check
      _
    $region27: #{tpu_custom_call.1} parent=1 // pred_check_branch
      %158 = sbr.rel (0) target = $region29
    $region28: #{tpu_custom_call.1} parent=1 // pred_region
      %160 = vsyncadd [#allocation6], 0
      %s162 = sshll.u32 [#allocation7], 4
      %s163 = int_to_ptr.vmem [resolvable:$true] %s162
      %s164 = sshll.u32 %s3, 4
      %s165 = int_to_ptr.hbm [resolvable:$true] %s164
      %167 = dma.vmem_to_hbm [thread:$0]  %s163, 16, %s165, [#allocation6]
    $region29: #{tpu_custom_call.1} parent=1 // pred_fallthru
      _
    // Predicated region
    $region30: #{tpu_custom_call.1} parent=1 // pred_check
      _
    $region31: #{tpu_custom_call.1} parent=1 // pred_check_branch
      %169 = sbr.rel (0) target = $region33
    $region32: #{tpu_custom_call.1} parent=1 // pred_region
      %171 = vsyncadd [#allocation9], 0
      %s173 = sshll.u32 [#allocation8], 4
      %s174 = int_to_ptr.vmem [resolvable:$true] %s173
      %s175 = sshll.u32 %s4, 4
      %s176 = int_to_ptr.hbm [resolvable:$true] %s175
      %178 = dma.vmem_to_hbm [thread:$0]  %s174, 16, %s176, [#allocation9]
    $region33: #{tpu_custom_call.1} parent=1 // pred_fallthru
      _
    // Predicated region
    $region34: #{tpu_custom_call.1} parent=1 // pred_check
      _
    $region35: #{tpu_custom_call.1} parent=1 // pred_check_branch
      %180 = sbr.rel (0) target = $region37
    $region36: #{tpu_custom_call.1} parent=1 // pred_region
      %182 = dma.done [#allocation6], 16
    $region37: #{tpu_custom_call.1} parent=1 // pred_fallthru
      _
    // Predicated region
    $region38: #{tpu_custom_call.1} parent=1 // pred_check
      _
    $region39: #{tpu_custom_call.1} parent=1 // pred_check_branch
      %184 = sbr.rel (0) target = $region41
    $region40: #{tpu_custom_call.1} parent=1 // pred_region
      %186 = dma.done [#allocation9], 16
    $region41: #{tpu_custom_call.1} parent=1 // pred_fallthru
      _
    %187 = vsyncpa [#allocation5], 1
    %188 = vsyncpa [#allocation6], 1
    %189 = vsyncpa [#allocation9], 1

</llo_original>
